<compile_context>
chip_gen: v5e
topology: v5e:2x2
jax: 0.10.0
libtpu: 0.0.40
codegen_flags: <defaults>
</compile_context>

<pallas_src>
import jax
import jax.numpy as jnp
import numpy as np
from jax.experimental import pallas as pl
from jax.experimental.pallas import tpu as pltpu

LANE = 128
COMPUTE_DTYPE = jnp.bfloat16      # MXU input dtype for layers 1/2; accumulation is f32


def _round_up(x, m):
    return (x + m - 1) // m * m


def droq_kernel(sa_ref, w1_ref, b1_ref, w2_ref, b2_ref, w3_ref, b3_ref, out_ref):
    # In-kernel f32 -> bf16 cast (free VPU work; avoids an HBM pad/cast pass).
    x = sa_ref[...].astype(COMPUTE_DTYPE)
    # Layer 1: (tb, D) @ (D, 512) on the MXU, f32 accumulation.
    h1 = jnp.dot(x, w1_ref[...], preferred_element_type=jnp.float32) + b1_ref[...]
    h1 = jnp.maximum(h1, 0.0).astype(COMPUTE_DTYPE)
    # Layer 2: (tb, 512) @ (512, 384) on the MXU, f32 accumulation.
    h2 = jnp.dot(h1, w2_ref[...], preferred_element_type=jnp.float32) + b2_ref[...]
    h2 = jnp.maximum(h2, 0.0)                       # keep f32 for the final layer
    # Layer 3 (N=1): VPU broadcast-multiply + XLU row-reduce instead of an MXU
    # matmul whose 127/128 result columns would be discarded.
    q = jnp.sum(h2 * w3_ref[...], axis=-1, keepdims=True) + b3_ref[...]
    out_ref[...] = q.astype(out_ref.dtype)          # (tb, 1) block of the (B, 1) output


def prepare_params(params, compute_dtype=COMPUTE_DTYPE):
    """One-time layout plumbing: zero-pad hidden dims to lane multiples
    (400 -> 512, 300 -> 384), keep the input dim D unpadded, cast layer-1/2
    weights to the MXU compute dtype (biases and the tiny layer-3 row stay f32).
    Zero padding keeps the math exact: ReLU(0 + 0) = 0 feeds zero rows/columns."""
    w1, b1, w2, b2, w3, b3 = (params[k] for k in ("w1", "b1", "w2", "b2", "w3", "b3"))
    D, H1 = w1.shape
    H2 = w2.shape[1]
    H1p, H2p = _round_up(H1, LANE), _round_up(H2, LANE)

    def pad2(a, shape, dtype):
        z = jnp.zeros(shape, dtype)
        return z.at[: a.shape[0], : a.shape[1]].set(a.astype(dtype))

    return {
        "w1": pad2(w1, (D, H1p), compute_dtype),          # (D, 512) bf16, D unpadded
        "b1": pad2(b1, (1, H1p), jnp.float32),            # (1, 512) f32
        "w2": pad2(w2, (H1p, H2p), compute_dtype),        # (512, 384) bf16
        "b2": pad2(b2, (1, H2p), jnp.float32),            # (1, 384) f32
        "w3": pad2(w3.T, (1, H2p), jnp.float32),          # (1, 384) f32 row of w3[:, 0]
        "b3": jnp.asarray(b3, jnp.float32).reshape(1, 1), # scalar bias, f32
    }


def _default_tb(B):
    """Per-generation batch tile: 256 matches the v6e/v7x 256x256 MXU M tile,
    128 is the native v5e tile; for B <= 128 a single full-array block is used.
    For 128 < B <= 256 use 128 so the grid has >= 2 steps (keeps both v7x
    TensorCores busy under 'parallel' semantics)."""
    if B <= LANE:
        return B
    if B <= 2 * LANE:
        return LANE
    kind = ""
    try:
        kind = jax.devices()[0].device_kind.lower()
    except Exception:
        pass
    return LANE if "v5" in kind else 2 * LANE


def droq_forward(sa, pparams, *, tb=None):
    """DroQ critic forward. sa: (B, state_dim+action_dim) f32. Returns (B, 1) f32."""
    w1, b1, w2, b2, w3, b3 = (pparams[k] for k in ("w1", "b1", "w2", "b2", "w3", "b3"))
    B, D = sa.shape
    assert D == w1.shape[0], "sa feature dim must match w1 rows"
    H1p = w1.shape[1]
    H2p = w2.shape[1]

    if tb is None:
        tb = _default_tb(B)
    tb = max(1, min(int(tb), B))
    grid = (pl.cdiv(B, tb),)

    flops = 2 * B * (D * H1p + H1p * H2p + H2p)
    bytes_accessed = (
        sa.size * sa.dtype.itemsize
        + sum(pparams[k].size * pparams[k].dtype.itemsize
              for k in ("w1", "b1", "w2", "b2", "w3", "b3"))
        + B * 4
    )

    # Weights/biases: constant block index -> DMA'd once, VMEM-resident across
    # grid steps; single-buffered (no point double-buffering a constant block).
    def wspec(shape):
        return pl.BlockSpec(shape, lambda i: (0, 0), pipeline_mode=pl.Buffered(1))

    out = pl.pallas_call(
        droq_kernel,
        out_shape=jax.ShapeDtypeStruct((B, 1), jnp.float32),
        grid_spec=pltpu.PrefetchScalarGridSpec(
            num_scalar_prefetch=0,
            grid=grid,
            in_specs=[
                pl.BlockSpec((tb, D), lambda i: (i, 0)),   # batch tile (tail masked)
                wspec((D, H1p)),
                wspec((1, H1p)),
                wspec((H1p, H2p)),
                wspec((1, H2p)),
                wspec((1, H2p)),
                wspec((1, 1)),
            ],
            out_specs=pl.BlockSpec((tb, 1), lambda i: (i, 0)),
        ),
        compiler_params=pltpu.CompilerParams(
            dimension_semantics=("parallel",),
            vmem_limit_bytes=8 * 1024 * 1024,
        ),
        cost_estimate=pl.CostEstimate(
            flops=flops, transcendentals=0, bytes_accessed=bytes_accessed),
    )(sa, w1, b1, w2, b2, w3, b3)

    return out


def init_droq_params(key, state_dim, action_dim):
    """Deterministic init mimicking PyTorch nn.Linear default (U[-1/sqrt(fan_in), +]).
    Weights stored as (in, out) so the kernel computes x @ W + b."""
    in_dim = state_dim + action_dim
    dims = [(in_dim, 400), (400, 300), (300, 1)]
    params = {}
    for li, (fan_in, fan_out) in enumerate(dims, start=1):
        key, kw, kb = jax.random.split(key, 3)
        bound = 1.0 / np.sqrt(fan_in)
        params[f"w{li}"] = jax.random.uniform(
            kw, (fan_in, fan_out), jnp.float32, -bound, bound)
        params[f"b{li}"] = jax.random.uniform(
            kb, (1, fan_out), jnp.float32, -bound, bound)
    return params


def droq_reference(sa, params):
    """Plain-JAX f32 reference (same math as the PyTorch nn.Sequential)."""
    h1 = jnp.maximum(sa @ params["w1"] + params["b1"], 0.0)
    h2 = jnp.maximum(h1 @ params["w2"] + params["b2"], 0.0)
    return h2 @ params["w3"] + params["b3"]


if __name__ == "__main__":
    key = jax.random.PRNGKey(0)

    batch = 8
    state_dim = 24
    action_dim = 8

    key, k_params, k_sa = jax.random.split(key, 3)
    params = init_droq_params(k_params, state_dim, action_dim)
    sa = jax.random.normal(k_sa, (batch, state_dim + action_dim), jnp.float32)

    pparams = prepare_params(params)          # one-time padding / bf16 cast
    fwd = jax.jit(lambda s: droq_forward(s, pparams))

    out = jax.block_until_ready(fwd(sa))

    ref = droq_reference(sa, params)
    # bf16 weights/activations in layers 1/2 (f32 accumulation, f32 layer 3)
    # -> loosened tolerance vs the f32 reference.  Validate over a training run
    # before committing to bf16 activations for TD targets.
    np.testing.assert_allclose(np.asarray(out), np.asarray(ref), rtol=5e-2, atol=5e-2)
    assert out.shape == (batch, 1)

    print("KERNEL_OK")
</pallas_src>

<mosaic_0001>
module attributes {stable_mosaic.version = 11 : i64} {
  func.func @droq_kernel(%arg0: i32, %arg1: memref<8x32xf32, #tpu.memory_space<vmem>>, %arg2: memref<32x512xbf16, #tpu.memory_space<vmem>>, %arg3: memref<1x512xf32, #tpu.memory_space<vmem>>, %arg4: memref<512x384xbf16, #tpu.memory_space<vmem>>, %arg5: memref<1x384xf32, #tpu.memory_space<vmem>>, %arg6: memref<1x384xf32, #tpu.memory_space<vmem>>, %arg7: memref<1x1xf32, #tpu.memory_space<vmem>>, %arg8: memref<8x1xf32, #tpu.memory_space<vmem>>) attributes {dimension_semantics = [#tpu.dimension_semantics<parallel>], iteration_bounds = array<i64: 1>, scalar_prefetch = 0 : i64, scratch_operands = 0 : i64, tpu.core_type = #tpu.core_type<tc>, window_params = [{transform_indices = @transform_0, window_bounds = array<i64: 8, 32>}, {pipeline_mode = #tpu.pipeline_mode<synchronous>, transform_indices = @transform_1, window_bounds = array<i64: 32, 512>}, {pipeline_mode = #tpu.pipeline_mode<synchronous>, transform_indices = @transform_2, window_bounds = array<i64: 1, 512>}, {pipeline_mode = #tpu.pipeline_mode<synchronous>, transform_indices = @transform_3, window_bounds = array<i64: 512, 384>}, {pipeline_mode = #tpu.pipeline_mode<synchronous>, transform_indices = @transform_4, window_bounds = array<i64: 1, 384>}, {pipeline_mode = #tpu.pipeline_mode<synchronous>, transform_indices = @transform_5, window_bounds = array<i64: 1, 384>}, {pipeline_mode = #tpu.pipeline_mode<synchronous>, transform_indices = @transform_6, window_bounds = array<i64: 1, 1>}, {transform_indices = @transform_7, window_bounds = array<i64: 8, 1>}]} {
    %c0 = arith.constant 0 : index
    %c0_0 = arith.constant 0 : index
    %0 = vector.load %arg1[%c0, %c0_0] : memref<8x32xf32, #tpu.memory_space<vmem>>, vector<8x32xf32>
    %1 = arith.truncf %0 : vector<8x32xf32> to vector<8x32xbf16>
    %c0_1 = arith.constant 0 : index
    %c0_2 = arith.constant 0 : index
    %2 = vector.load %arg2[%c0_1, %c0_2] : memref<32x512xbf16, #tpu.memory_space<vmem>>, vector<32x512xbf16>
    %cst = arith.constant dense<0.000000e+00> : vector<8x512xf32>
    %3 = tpu.matmul %1, %2, %cst {dimension_numbers = #tpu.dot_dimension_numbers<[1], [0], [0], [1], [0, 0, 1, 1], [], []>} : vector<8x32xbf16>, vector<32x512xbf16>, vector<8x512xf32> -> vector<8x512xf32>
    %c0_3 = arith.constant 0 : index
    %c0_4 = arith.constant 0 : index
    %4 = vector.load %arg3[%c0_3, %c0_4] : memref<1x512xf32, #tpu.memory_space<vmem>>, vector<1x512xf32>
    %5 = vector.broadcast %4 : vector<1x512xf32> to vector<8x512xf32>
    %6 = arith.addf %3, %5 : vector<8x512xf32>
    %cst_5 = arith.constant 0.000000e+00 : f32
    %7 = vector.broadcast %cst_5 : f32 to vector<8x512xf32>
    %8 = arith.maximumf %6, %7 : vector<8x512xf32>
    %9 = arith.truncf %8 : vector<8x512xf32> to vector<8x512xbf16>
    %c0_6 = arith.constant 0 : index
    %c0_7 = arith.constant 0 : index
    %10 = vector.load %arg4[%c0_6, %c0_7] : memref<512x384xbf16, #tpu.memory_space<vmem>>, vector<512x384xbf16>
    %cst_8 = arith.constant dense<0.000000e+00> : vector<8x384xf32>
    %11 = tpu.matmul %9, %10, %cst_8 {dimension_numbers = #tpu.dot_dimension_numbers<[1], [0], [0], [1], [0, 0, 1, 1], [], []>} : vector<8x512xbf16>, vector<512x384xbf16>, vector<8x384xf32> -> vector<8x384xf32>
    %c0_9 = arith.constant 0 : index
    %c0_10 = arith.constant 0 : index
    %12 = vector.load %arg5[%c0_9, %c0_10] : memref<1x384xf32, #tpu.memory_space<vmem>>, vector<1x384xf32>
    %13 = vector.broadcast %12 : vector<1x384xf32> to vector<8x384xf32>
    %14 = arith.addf %11, %13 : vector<8x384xf32>
    %cst_11 = arith.constant 0.000000e+00 : f32
    %15 = vector.broadcast %cst_11 : f32 to vector<8x384xf32>
    %16 = arith.maximumf %14, %15 : vector<8x384xf32>
    %c0_12 = arith.constant 0 : index
    %c0_13 = arith.constant 0 : index
    %17 = vector.load %arg6[%c0_12, %c0_13] : memref<1x384xf32, #tpu.memory_space<vmem>>, vector<1x384xf32>
    %18 = vector.broadcast %17 : vector<1x384xf32> to vector<8x384xf32>
    %19 = arith.mulf %16, %18 : vector<8x384xf32>
    %cst_14 = arith.constant dense<0.000000e+00> : vector<8xf32>
    %20 = vector.multi_reduction <add>, %19, %cst_14 [1] : vector<8x384xf32> to vector<8xf32>
    %21 = vector.shape_cast %20 : vector<8xf32> to vector<8x1xf32>
    %c0_15 = arith.constant 0 : index
    %c0_16 = arith.constant 0 : index
    %22 = vector.load %arg7[%c0_15, %c0_16] : memref<1x1xf32, #tpu.memory_space<vmem>>, vector<1x1xf32>
    %23 = vector.broadcast %22 : vector<1x1xf32> to vector<8x1xf32>
    %24 = arith.addf %21, %23 : vector<8x1xf32>
    %c0_17 = arith.constant 0 : index
    %c0_18 = arith.constant 0 : index
    %25 = vector.load %arg8[%c0_17, %c0_18] : memref<8x1xf32, #tpu.memory_space<vmem>>, vector<8x1xf32>
    tpu.vector_store %arg8[%c0_17, %c0_18], %24 {strides = array<i32>} : memref<8x1xf32, #tpu.memory_space<vmem>>, vector<8x1xf32>,
    return
  }
  func.func @transform_0(%arg0: i32) -> (i32, i32) {
    %c0_i32 = arith.constant 0 : i32
    %c0_i32_0 = arith.constant 0 : i32
    return %arg0, %c0_i32 : i32, i32
  }
  func.func @transform_1(%arg0: i32) -> (i32, i32) {
    %c0_i32 = arith.constant 0 : i32
    %c0_i32_0 = arith.constant 0 : i32
    %c0_i32_1 = arith.constant 0 : i32
    return %c0_i32, %c0_i32_0 : i32, i32
  }
  func.func @transform_2(%arg0: i32) -> (i32, i32) {
    %c0_i32 = arith.constant 0 : i32
    %c0_i32_0 = arith.constant 0 : i32
    %c0_i32_1 = arith.constant 0 : i32
    return %c0_i32, %c0_i32_0 : i32, i32
  }
  func.func @transform_3(%arg0: i32) -> (i32, i32) {
    %c0_i32 = arith.constant 0 : i32
    %c0_i32_0 = arith.constant 0 : i32
    %c0_i32_1 = arith.constant 0 : i32
    return %c0_i32, %c0_i32_0 : i32, i32
  }
  func.func @transform_4(%arg0: i32) -> (i32, i32) {
    %c0_i32 = arith.constant 0 : i32
    %c0_i32_0 = arith.constant 0 : i32
    %c0_i32_1 = arith.constant 0 : i32
    return %c0_i32, %c0_i32_0 : i32, i32
  }
  func.func @transform_5(%arg0: i32) -> (i32, i32) {
    %c0_i32 = arith.constant 0 : i32
    %c0_i32_0 = arith.constant 0 : i32
    %c0_i32_1 = arith.constant 0 : i32
    return %c0_i32, %c0_i32_0 : i32, i32
  }
  func.func @transform_6(%arg0: i32) -> (i32, i32) {
    %c0_i32 = arith.constant 0 : i32
    %c0_i32_0 = arith.constant 0 : i32
    %c0_i32_1 = arith.constant 0 : i32
    return %c0_i32, %c0_i32_0 : i32, i32
  }
  func.func @transform_7(%arg0: i32) -> (i32, i32) {
    %c0_i32 = arith.constant 0 : i32
    %c0_i32_0 = arith.constant 0 : i32
    return %arg0, %c0_i32 : i32, i32
  }
}

</mosaic_0001>

<llo_original>
// kernel: _lambda_.1
$region0: #{_lambda_.1}
  #allocation0 [shape = 'u32[]', space=smem, size = 0x4, offset = 0x4, fixed_abs, tag = 'smem constant byte address 0x4 - core index']
  #allocation1 [shape = 'u32[72,128]{1,0:T(1,128)}', space=vmem, size = 0x9000, scoped, tag = 'internal scratch']
  #allocation2 [shape = 'f32[1,1]{1,0:T(1,128)S(1)}', space=vmem, size = 0x200, scoped, tag = 'scoped memory for _lambda_.1']
  %s0 = inlined_call_operand.hbm [shape: f32[8,32], index: 0, kind: input, shape index: {}]
  %s1 = inlined_call_operand.hbm [shape: bf16[32,512], index: 1, kind: input, shape index: {}]
  %s2 = inlined_call_operand.hbm [shape: f32[1,512], index: 2, kind: input, shape index: {}]
  %s3 = inlined_call_operand.hbm [shape: bf16[512,384], index: 3, kind: input, shape index: {}]
  %s4 = inlined_call_operand.hbm [shape: f32[1,384], index: 4, kind: input, shape index: {}]
  %s5 = inlined_call_operand.vmem [shape: f32[1,384], index: 5, kind: input, shape index: {}]
  %s6 = inlined_call_operand.<no memory space> [shape: f32[1,1], index: 6, kind: input, shape index: {}]
  %s7 = inlined_call_operand.vmem [shape: f32[8,1], index: 7, kind: output, shape index: {}]
  %s8 = sld [smem:[#allocation0]]
  $region58: #{_lambda_.1} parent=0
    _
  %s10 = ssub.s32 1, %s8
  %s11 = scalar_select 0, %s10, %s8
  %v12 = vstv %s6
  %13 = vst [vmem:[#allocation2] sm:$0x1] %v12
  $region1: #{_lambda_.1} parent=0
    #allocation3 [shape = 'u8[4096]{0}', space=vmem, size = 0x1000, scoped, tag = 'input window, operand 0, single buffered']
    #allocation4 [shape = 's32[1]{0}', space=sflag, size = 0x4, scoped, tag = 'scoped memory for _lambda_.1']
    #allocation5 [shape = 'u8[32768]{0}', space=vmem, size = 0x8000, scoped, tag = 'input window, operand 1, single buffered']
    #allocation6 [shape = 's32[1]{0}', space=sflag, size = 0x4, scoped, tag = 'scoped memory for _lambda_.1']
    #allocation7 [shape = 'u8[2048]{0}', space=vmem, size = 0x800, scoped, tag = 'input window, operand 2, single buffered']
    #allocation8 [shape = 'u8[393216]{0}', space=vmem, size = 0x60000, scoped, tag = 'input window, operand 3, single buffered']
    #allocation9 [shape = 's32[1]{0}', space=sflag, size = 0x4, scoped, tag = 'scoped memory for _lambda_.1']
    #allocation10 [shape = 'u8[1536]{0}', space=vmem, size = 0x800, scoped, tag = 'input window, operand 4, single buffered']
    %14 = vsyncpa [#allocation4], 0
    %15 = vsyncpa [#allocation6], 0
    %16 = vsyncpa [#allocation9], 0
    // Predicated region
    $region2: #{_lambda_.1} parent=1 // pred_check
      _
    $region3: #{_lambda_.1} parent=1 // pred_check_branch
      %18 = sbr.rel (0) target = $region5
    $region4: #{_lambda_.1} parent=1 // pred_region
      %20 = vsyncadd [#allocation4], 0
      %s22 = sshll.u32 %s0, 4
      %s23 = int_to_ptr.hbm [resolvable:$true] %s22
      %s24 = sshll.u32 [#allocation3], 4
      %s25 = int_to_ptr.vmem [resolvable:$true] %s24
      %27 = dma.hbm_to_vmem [thread:$0]  %s23, 128, %s25, [#allocation4]
    $region5: #{_lambda_.1} parent=1 // pred_fallthru
      _
    // Predicated region
    $region6: #{_lambda_.1} parent=1 // pred_check
      _
    $region7: #{_lambda_.1} parent=1 // pred_check_branch
      %29 = sbr.rel (0) target = $region9
    $region8: #{_lambda_.1} parent=1 // pred_region
      %31 = vsyncadd [#allocation6], 0
      %s32 = sshll.u32 %s1, 4
      %s33 = int_to_ptr.hbm [resolvable:$true] %s32
      %s34 = sshll.u32 [#allocation5], 4
      %s35 = int_to_ptr.vmem [resolvable:$true] %s34
      %40 = dma.hbm_to_vmem [thread:$0]  %s33, 1024, %s35, [#allocation6], 256, 256, 16
    $region9: #{_lambda_.1} parent=1 // pred_fallthru
      _
    // Predicated region
    $region10: #{_lambda_.1} parent=1 // pred_check
      _
    $region11: #{_lambda_.1} parent=1 // pred_check_branch
      %42 = sbr.rel (0) target = $region13
    $region12: #{_lambda_.1} parent=1 // pred_region
      %44 = vsyncadd [#allocation6], 0
      %s46 = sshll.u32 %s2, 4
      %s47 = int_to_ptr.hbm [resolvable:$true] %s46
      %s48 = sshll.u32 [#allocation7], 4
      %s49 = int_to_ptr.vmem [resolvable:$true] %s48
      %51 = dma.hbm_to_vmem [thread:$0]  %s47, 64, %s49, [#allocation6]
    $region13: #{_lambda_.1} parent=1 // pred_fallthru
      _
    // Predicated region
    $region14: #{_lambda_.1} parent=1 // pred_check
      _
    $region15: #{_lambda_.1} parent=1 // pred_check_branch
      %53 = sbr.rel (0) target = $region17
    $region16: #{_lambda_.1} parent=1 // pred_region
      %55 = vsyncadd [#allocation9], 0
      %s56 = sshll.u32 %s3, 4
      %s57 = int_to_ptr.hbm [resolvable:$true] %s56
      %s58 = sshll.u32 [#allocation8], 4
      %s59 = int_to_ptr.vmem [resolvable:$true] %s58
      %64 = dma.hbm_to_vmem [thread:$0]  %s57, 12288, %s59, [#allocation9], 192, 192, 12
    $region17: #{_lambda_.1} parent=1 // pred_fallthru
      _
    // Predicated region
    $region18: #{_lambda_.1} parent=1 // pred_check
      _
    $region19: #{_lambda_.1} parent=1 // pred_check_branch
      %66 = sbr.rel (0) target = $region21
    $region20: #{_lambda_.1} parent=1 // pred_region
      %68 = vsyncadd [#allocation9], 0
      %s70 = sshll.u32 %s4, 4
      %s71 = int_to_ptr.hbm [resolvable:$true] %s70
      %s72 = sshll.u32 [#allocation10], 4
      %s73 = int_to_ptr.vmem [resolvable:$true] %s72
      %75 = dma.hbm_to_vmem [thread:$0]  %s71, 48, %s73, [#allocation9]
    $region21: #{_lambda_.1} parent=1 // pred_fallthru
      _
    // Predicated region
    $region22: #{_lambda_.1} parent=1 // pred_check
      _
    $region23: #{_lambda_.1} parent=1 // pred_check_branch
      %77 = sbr.rel (0) target = $region25
    $region24: #{_lambda_.1} parent=1 // pred_region
      _
    $region25: #{_lambda_.1} parent=1 // pred_fallthru
      _
    // Predicated region
    $region26: #{_lambda_.1} parent=1 // pred_check
      _
    $region27: #{_lambda_.1} parent=1 // pred_check_branch
      %79 = sbr.rel (0) target = $region29
    $region28: #{_lambda_.1} parent=1 // pred_region
      _
    $region29: #{_lambda_.1} parent=1 // pred_fallthru
      _
    // Predicated region
    $region30: #{_lambda_.1} parent=1 // pred_check
      _
    $region31: #{_lambda_.1} parent=1 // pred_check_branch
      %81 = sbr.rel (0) target = $region33
    $region32: #{_lambda_.1} parent=1 // pred_region
      %83 = dma.done [#allocation4], 128
    $region33: #{_lambda_.1} parent=1 // pred_fallthru
      _
    // Predicated region
    $region34: #{_lambda_.1} parent=1 // pred_check
      _
    $region35: #{_lambda_.1} parent=1 // pred_check_branch
      %85 = sbr.rel (0) target = $region37
    $region36: #{_lambda_.1} parent=1 // pred_region
      %87 = dma.done [#allocation6], 1024
    $region37: #{_lambda_.1} parent=1 // pred_fallthru
      _
    // Predicated region
    $region38: #{_lambda_.1} parent=1 // pred_check
      _
    $region39: #{_lambda_.1} parent=1 // pred_check_branch
      %89 = sbr.rel (0) target = $region41
    $region40: #{_lambda_.1} parent=1 // pred_region
      %91 = dma.done [#allocation6], 64
    $region41: #{_lambda_.1} parent=1 // pred_fallthru
      _
    // Predicated region
    $region42: #{_lambda_.1} parent=1 // pred_check
      _
    $region43: #{_lambda_.1} parent=1 // pred_check_branch
      %93 = sbr.rel (0) target = $region45
    $region44: #{_lambda_.1} parent=1 // pred_region
      %95 = dma.done [#allocation9], 12288
    $region45: #{_lambda_.1} parent=1 // pred_fallthru
      _
    // Predicated region
    $region46: #{_lambda_.1} parent=1 // pred_check
      _
    $region47: #{_lambda_.1} parent=1 // pred_check_branch
      %97 = sbr.rel (0) target = $region49
    $region48: #{_lambda_.1} parent=1 // pred_region
      %99 = dma.done [#allocation9], 48
    $region49: #{_lambda_.1} parent=1 // pred_fallthru
      _
    %v101 = vld [vmem:[#allocation3] sm:$0xff]
    %v102 = vpack.c.bf16 %v101, %v101
    %v103 = vld [vmem:[#allocation5] sm:$0xff]
    %v104 = vld [vmem:[#allocation5 + $0x8] sm:$0xff]
    %v105 = vld [vmem:[#allocation5 + $0x10] sm:$0xff]
    %v106 = vld [vmem:[#allocation5 + $0x18] sm:$0xff]
    %v107 = vld [vmem:[#allocation5 + $0x20] sm:$0xff]
    %v108 = vld [vmem:[#allocation5 + $0x28] sm:$0xff]
    %v109 = vld [vmem:[#allocation5 + $0x30] sm:$0xff]
    %v110 = vld [vmem:[#allocation5 + $0x38] sm:$0xff]
    %v111 = vld [vmem:[#allocation7] sm:$0xf]
    %v113 = vperm.slane %v111, 0
    %v114 = vperm.slane %v111, 1
    %v115 = vperm.slane %v111, 2
    %v116 = vperm.slane %v111, 3
    %v129 = vunpack.c.l.b16 %v103
    %v130 = vunpack.c.h.b16 %v103
    %v131 = vunpack.c.l.b16 %v104
    %v132 = vunpack.c.h.b16 %v104
    %v133 = vunpack.c.l.b16 %v105
    %v134 = vunpack.c.h.b16 %v105
    %v135 = vunpack.c.l.b16 %v106
    %v136 = vunpack.c.h.b16 %v106
    %v137 = vunpack.c.l.b16 %v107
    %v138 = vunpack.c.h.b16 %v107
    %v139 = vunpack.c.l.b16 %v108
    %v140 = vunpack.c.h.b16 %v108
    %v141 = vunpack.c.l.b16 %v109
    %v142 = vunpack.c.h.b16 %v109
    %v143 = vunpack.c.l.b16 %v110
    %v144 = vunpack.c.h.b16 %v110
    %v145 = vpack.c.b16 %v133, %v129
    %v146 = vpack.c.b16 %v134, %v130
    %v147 = vpack.c.b16 %v135, %v131
    %v148 = vpack.c.b16 %v136, %v132
    %v149 = vpack.c.b16 %v141, %v137
    %v150 = vpack.c.b16 %v142, %v138
    %v151 = vpack.c.b16 %v143, %v139
    %v152 = vpack.c.b16 %v144, %v140
    %vm161 = vcmask 261120
    %v163 = vsel %vm161, %v102, 0
    %165 = vmatpush.bf16.msra.mxu0 0
    %166 = vmatpush.bf16.msra.mxu0 0
    %167 = vmatpush.bf16.msra.mxu0 0
    %168 = vmatpush.bf16.msra.mxu0 0
    %169 = vmatpush.bf16.msra.mxu0 0
    %170 = vmatpush.bf16.msra.mxu0 0
    %171 = vmatpush.bf16.msra.mxu0 %v149
    %172 = vmatpush.bf16.msra.mxu0 %v145
    %173 = vmatmul.bf16.gmra.mxu0 %v163
    %v174 = vpop.f32.mrf.mxu0
    %v175 = vadd.f32 %v113, %v174
    %v176 = vpop.f32.mrf.mxu0
    %177 = vdwg.mxu0
    %178 = vmatpush.bf16.msra.mxu0 0
    %179 = vmatpush.bf16.msra.mxu0 0
    %180 = vmatpush.bf16.msra.mxu0 0
    %181 = vmatpush.bf16.msra.mxu0 0
    %182 = vmatpush.bf16.msra.mxu0 0
    %183 = vmatpush.bf16.msra.mxu0 0
    %184 = vmatpush.bf16.msra.mxu0 %v150
    %185 = vmatpush.bf16.msra.mxu0 %v146
    %186 = vmatmul.bf16.gmra.mxu0 %v163
    %v187 = vpop.f32.mrf.mxu0
    %v188 = vadd.f32 %v114, %v187
    %v189 = vpop.f32.mrf.mxu0
    %190 = vdwg.mxu0
    %191 = vmatpush.bf16.msra.mxu0 0
    %192 = vmatpush.bf16.msra.mxu0 0
    %193 = vmatpush.bf16.msra.mxu0 0
    %194 = vmatpush.bf16.msra.mxu0 0
    %195 = vmatpush.bf16.msra.mxu0 0
    %196 = vmatpush.bf16.msra.mxu0 0
    %197 = vmatpush.bf16.msra.mxu0 %v151
    %198 = vmatpush.bf16.msra.mxu0 %v147
    %199 = vmatmul.bf16.gmra.mxu0 %v163
    %v200 = vpop.f32.mrf.mxu0
    %v201 = vadd.f32 %v115, %v200
    %v202 = vpop.f32.mrf.mxu0
    %203 = vdwg.mxu0
    %204 = vmatpush.bf16.msra.mxu0 0
    %205 = vmatpush.bf16.msra.mxu0 0
    %206 = vmatpush.bf16.msra.mxu0 0
    %207 = vmatpush.bf16.msra.mxu0 0
    %208 = vmatpush.bf16.msra.mxu0 0
    %209 = vmatpush.bf16.msra.mxu0 0
    %210 = vmatpush.bf16.msra.mxu0 %v152
    %211 = vmatpush.bf16.msra.mxu0 %v148
    %212 = vmatmul.bf16.gmra.mxu0 %v163
    %v213 = vpop.f32.mrf.mxu0
    %v214 = vadd.f32 %v116, %v213
    %v215 = vpop.f32.mrf.mxu0
    %216 = vdwg.mxu0
    %v217 = vmax.f32 %v175, 0.0
    %v218 = vmax.f32 %v188, 0.0
    %v219 = vmax.f32 %v201, 0.0
    %v220 = vmax.f32 %v214, 0.0
    %v221 = vpack.c.bf16 %v217, %v217
    %v222 = vpack.c.bf16 %v218, %v218
    %v223 = vpack.c.bf16 %v219, %v219
    %v224 = vpack.c.bf16 %v220, %v220
    %v225 = vld [vmem:[#allocation8] sm:$0xff]
    %v226 = vld [vmem:[#allocation8 + $0x8] sm:$0xf]
    %v227 = vld [vmem:[#allocation8 + $0xc] sm:$0xff]
    %v228 = vld [vmem:[#allocation8 + $0x14] sm:$0xf]
    %v229 = vld [vmem:[#allocation8 + $0x18] sm:$0xff]
    %v230 = vld [vmem:[#allocation8 + $0x20] sm:$0xf]
    %v231 = vld [vmem:[#allocation8 + $0x24] sm:$0xff]
    %v232 = vld [vmem:[#allocation8 + $0x2c] sm:$0xf]
    %v233 = vld [vmem:[#allocation8 + $0x30] sm:$0xff]
    %v234 = vld [vmem:[#allocation8 + $0x38] sm:$0xf]
    %v235 = vld [vmem:[#allocation8 + $0x3c] sm:$0xff]
    %v236 = vld [vmem:[#allocation8 + $0x44] sm:$0xf]
    %v237 = vld [vmem:[#allocation8 + $0x48] sm:$0xff]
    %v238 = vld [vmem:[#allocation8 + $0x50] sm:$0xf]
    %v239 = vld [vmem:[#allocation8 + $0x54] sm:$0xff]
    %v240 = vld [vmem:[#allocation8 + $0x5c] sm:$0xf]
    %v241 = vld [vmem:[#allocation8 + $0x60] sm:$0xff]
    %v242 = vld [vmem:[#allocation8 + $0x68] sm:$0xf]
    %v243 = vld [vmem:[#allocation8 + $0x6c] sm:$0xff]
    %v244 = vld [vmem:[#allocation8 + $0x74] sm:$0xf]
    %v245 = vld [vmem:[#allocation8 + $0x78] sm:$0xff]
    %v246 = vld [vmem:[#allocation8 + $0x80] sm:$0xf]
    %v247 = vld [vmem:[#allocation8 + $0x84] sm:$0xff]
    %v248 = vld [vmem:[#allocation8 + $0x8c] sm:$0xf]
    %v249 = vld [vmem:[#allocation8 + $0x90] sm:$0xff]
    %v250 = vld [vmem:[#allocation8 + $0x98] sm:$0xf]
    %v251 = vld [vmem:[#allocation8 + $0x9c] sm:$0xff]
    %v252 = vld [vmem:[#allocation8 + $0xa4] sm:$0xf]
    %v253 = vld [vmem:[#allocation8 + $0xa8] sm:$0xff]
    %v254 = vld [vmem:[#allocation8 + $0xb0] sm:$0xf]
    %v255 = vld [vmem:[#allocation8 + $0xb4] sm:$0xff]
    %v256 = vld [vmem:[#allocation8 + $0xbc] sm:$0xf]
    %v257 = vld [vmem:[#allocation8 + $0xc0] sm:$0xff]
    %v258 = vld [vmem:[#allocation8 + $0xc8] sm:$0xf]
    %v259 = vld [vmem:[#allocation8 + $0xcc] sm:$0xff]
    %v260 = vld [vmem:[#allocation8 + $0xd4] sm:$0xf]
    %v261 = vld [vmem:[#allocation8 + $0xd8] sm:$0xff]
    %v262 = vld [vmem:[#allocation8 + $0xe0] sm:$0xf]
    %v263 = vld [vmem:[#allocation8 + $0xe4] sm:$0xff]
    %v264 = vld [vmem:[#allocation8 + $0xec] sm:$0xf]
    %v265 = vld [vmem:[#allocation8 + $0xf0] sm:$0xff]
    %v266 = vld [vmem:[#allocation8 + $0xf8] sm:$0xf]
    %v267 = vld [vmem:[#allocation8 + $0xfc] sm:$0xff]
    %v268 = vld [vmem:[#allocation8 + $0x104] sm:$0xf]
    %v269 = vld [vmem:[#allocation8 + $0x108] sm:$0xff]
    %v270 = vld [vmem:[#allocation8 + $0x110] sm:$0xf]
    %v271 = vld [vmem:[#allocation8 + $0x114] sm:$0xff]
    %v272 = vld [vmem:[#allocation8 + $0x11c] sm:$0xf]
    %v273 = vld [vmem:[#allocation8 + $0x120] sm:$0xff]
    %v274 = vld [vmem:[#allocation8 + $0x128] sm:$0xf]
    %v275 = vld [vmem:[#allocation8 + $0x12c] sm:$0xff]
    %v276 = vld [vmem:[#allocation8 + $0x134] sm:$0xf]
    %v277 = vld [vmem:[#allocation8 + $0x138] sm:$0xff]
    %v278 = vld [vmem:[#allocation8 + $0x140] sm:$0xf]
    %v279 = vld [vmem:[#allocation8 + $0x144] sm:$0xff]
    %v280 = vld [vmem:[#allocation8 + $0x14c] sm:$0xf]
    %v281 = vld [vmem:[#allocation8 + $0x150] sm:$0xff]
    %v282 = vld [vmem:[#allocation8 + $0x158] sm:$0xf]
    %v283 = vld [vmem:[#allocation8 + $0x15c] sm:$0xff]
    %v284 = vld [vmem:[#allocation8 + $0x164] sm:$0xf]
    %v285 = vld [vmem:[#allocation8 + $0x168] sm:$0xff]
    %v286 = vld [vmem:[#allocation8 + $0x170] sm:$0xf]
    %v287 = vld [vmem:[#allocation8 + $0x174] sm:$0xff]
    %v288 = vld [vmem:[#allocation8 + $0x17c] sm:$0xf]
    %v289 = vld [vmem:[#allocation8 + $0x180] sm:$0xff]
    %v290 = vld [vmem:[#allocation8 + $0x188] sm:$0xf]
    %v291 = vld [vmem:[#allocation8 + $0x18c] sm:$0xff]
    %v292 = vld [vmem:[#allocation8 + $0x194] sm:$0xf]
    %v293 = vld [vmem:[#allocation8 + $0x198] sm:$0xff]
    %v294 = vld [vmem:[#allocation8 + $0x1a0] sm:$0xf]
    %v295 = vld [vmem:[#allocation8 + $0x1a4] sm:$0xff]
    %v296 = vld [vmem:[#allocation8 + $0x1ac] sm:$0xf]
    %v297 = vld [vmem:[#allocation8 + $0x1b0] sm:$0xff]
    %v298 = vld [vmem:[#allocation8 + $0x1b8] sm:$0xf]
    %v299 = vld [vmem:[#allocation8 + $0x1bc] sm:$0xff]
    %v300 = vld [vmem:[#allocation8 + $0x1c4] sm:$0xf]
    %v301 = vld [vmem:[#allocation8 + $0x1c8] sm:$0xff]
    %v302 = vld [vmem:[#allocation8 + $0x1d0] sm:$0xf]
    %v303 = vld [vmem:[#allocation8 + $0x1d4] sm:$0xff]
    %v304 = vld [vmem:[#allocation8 + $0x1dc] sm:$0xf]
    %v305 = vld [vmem:[#allocation8 + $0x1e0] sm:$0xff]
    %v306 = vld [vmem:[#allocation8 + $0x1e8] sm:$0xf]
    %v307 = vld [vmem:[#allocation8 + $0x1ec] sm:$0xff]
    %v308 = vld [vmem:[#allocation8 + $0x1f4] sm:$0xf]
    %v309 = vld [vmem:[#allocation8 + $0x1f8] sm:$0xff]
    %v310 = vld [vmem:[#allocation8 + $0x200] sm:$0xf]
    %v311 = vld [vmem:[#allocation8 + $0x204] sm:$0xff]
    %v312 = vld [vmem:[#allocation8 + $0x20c] sm:$0xf]
    %v313 = vld [vmem:[#allocation8 + $0x210] sm:$0xff]
    %v314 = vld [vmem:[#allocation8 + $0x218] sm:$0xf]
    %v315 = vld [vmem:[#allocation8 + $0x21c] sm:$0xff]
    %v316 = vld [vmem:[#allocation8 + $0x224] sm:$0xf]
    %v317 = vld [vmem:[#allocation8 + $0x228] sm:$0xff]
    %v318 = vld [vmem:[#allocation8 + $0x230] sm:$0xf]
    %v319 = vld [vmem:[#allocation8 + $0x234] sm:$0xff]
    %v320 = vld [vmem:[#allocation8 + $0x23c] sm:$0xf]
    %v321 = vld [vmem:[#allocation8 + $0x240] sm:$0xff]
    %v322 = vld [vmem:[#allocation8 + $0x248] sm:$0xf]
    %v323 = vld [vmem:[#allocation8 + $0x24c] sm:$0xff]
    %v324 = vld [vmem:[#allocation8 + $0x254] sm:$0xf]
    %v325 = vld [vmem:[#allocation8 + $0x258] sm:$0xff]
    %v326 = vld [vmem:[#allocation8 + $0x260] sm:$0xf]
    %v327 = vld [vmem:[#allocation8 + $0x264] sm:$0xff]
    %v328 = vld [vmem:[#allocation8 + $0x26c] sm:$0xf]
    %v329 = vld [vmem:[#allocation8 + $0x270] sm:$0xff]
    %v330 = vld [vmem:[#allocation8 + $0x278] sm:$0xf]
    %v331 = vld [vmem:[#allocation8 + $0x27c] sm:$0xff]
    %v332 = vld [vmem:[#allocation8 + $0x284] sm:$0xf]
    %v333 = vld [vmem:[#allocation8 + $0x288] sm:$0xff]
    %v334 = vld [vmem:[#allocation8 + $0x290] sm:$0xf]
    %v335 = vld [vmem:[#allocation8 + $0x294] sm:$0xff]
    %v336 = vld [vmem:[#allocation8 + $0x29c] sm:$0xf]
    %v337 = vld [vmem:[#allocation8 + $0x2a0] sm:$0xff]
    %v338 = vld [vmem:[#allocation8 + $0x2a8] sm:$0xf]
    %v339 = vld [vmem:[#allocation8 + $0x2ac] sm:$0xff]
    %v340 = vld [vmem:[#allocation8 + $0x2b4] sm:$0xf]
    %v341 = vld [vmem:[#allocation8 + $0x2b8] sm:$0xff]
    %v342 = vld [vmem:[#allocation8 + $0x2c0] sm:$0xf]
    %v343 = vld [vmem:[#allocation8 + $0x2c4] sm:$0xff]
    %v344 = vld [vmem:[#allocation8 + $0x2cc] sm:$0xf]
    %v345 = vld [vmem:[#allocation8 + $0x2d0] sm:$0xff]
    %v346 = vld [vmem:[#allocation8 + $0x2d8] sm:$0xf]
    %v347 = vld [vmem:[#allocation8 + $0x2dc] sm:$0xff]
    %v348 = vld [vmem:[#allocation8 + $0x2e4] sm:$0xf]
    %v349 = vld [vmem:[#allocation8 + $0x2e8] sm:$0xff]
    %v350 = vld [vmem:[#allocation8 + $0x2f0] sm:$0xf]
    %v351 = vld [vmem:[#allocation8 + $0x2f4] sm:$0xff]
    %v352 = vld [vmem:[#allocation8 + $0x2fc] sm:$0xf]
    %v353 = vld [vmem:[#allocation10] sm:$0x7]
    %v355 = vperm.slane %v353, 0
    %v356 = vperm.slane %v353, 1
    %v357 = vperm.slane %v353, 2
    %v489 = vunpack.c.l.b16 %v225
    %v490 = vunpack.c.h.b16 %v225
    %v491 = vunpack.c.l.b16 %v226
    %v492 = vunpack.c.l.b16 %v227
    %v493 = vunpack.c.h.b16 %v227
    %v494 = vunpack.c.l.b16 %v228
    %v495 = vunpack.c.l.b16 %v229
    %v496 = vunpack.c.h.b16 %v229
    %v497 = vunpack.c.l.b16 %v230
    %v498 = vunpack.c.l.b16 %v231
    %v499 = vunpack.c.h.b16 %v231
    %v500 = vunpack.c.l.b16 %v232
    %v501 = vunpack.c.l.b16 %v233
    %v502 = vunpack.c.h.b16 %v233
    %v503 = vunpack.c.l.b16 %v234
    %v504 = vunpack.c.l.b16 %v235
    %v505 = vunpack.c.h.b16 %v235
    %v506 = vunpack.c.l.b16 %v236
    %v507 = vunpack.c.l.b16 %v237
    %v508 = vunpack.c.h.b16 %v237
    %v509 = vunpack.c.l.b16 %v238
    %v510 = vunpack.c.l.b16 %v239
    %v511 = vunpack.c.h.b16 %v239
    %v512 = vunpack.c.l.b16 %v240
    %v513 = vunpack.c.l.b16 %v241
    %v514 = vunpack.c.h.b16 %v241
    %v515 = vunpack.c.l.b16 %v242
    %v516 = vunpack.c.l.b16 %v243
    %v517 = vunpack.c.h.b16 %v243
    %v518 = vunpack.c.l.b16 %v244
    %v519 = vunpack.c.l.b16 %v245
    %v520 = vunpack.c.h.b16 %v245
    %v521 = vunpack.c.l.b16 %v246
    %v522 = vunpack.c.l.b16 %v247
    %v523 = vunpack.c.h.b16 %v247
    %v524 = vunpack.c.l.b16 %v248
    %v525 = vunpack.c.l.b16 %v249
    %v526 = vunpack.c.h.b16 %v249
    %v527 = vunpack.c.l.b16 %v250
    %v528 = vunpack.c.l.b16 %v251
    %v529 = vunpack.c.h.b16 %v251
    %v530 = vunpack.c.l.b16 %v252
    %v531 = vunpack.c.l.b16 %v253
    %v532 = vunpack.c.h.b16 %v253
    %v533 = vunpack.c.l.b16 %v254
    %v534 = vunpack.c.l.b16 %v255
    %v535 = vunpack.c.h.b16 %v255
    %v536 = vunpack.c.l.b16 %v256
    %v537 = vunpack.c.l.b16 %v257
    %v538 = vunpack.c.h.b16 %v257
    %v539 = vunpack.c.l.b16 %v258
    %v540 = vunpack.c.l.b16 %v259
    %v541 = vunpack.c.h.b16 %v259
    %v542 = vunpack.c.l.b16 %v260
    %v543 = vunpack.c.l.b16 %v261
    %v544 = vunpack.c.h.b16 %v261
    %v545 = vunpack.c.l.b16 %v262
    %v546 = vunpack.c.l.b16 %v263
    %v547 = vunpack.c.h.b16 %v263
    %v548 = vunpack.c.l.b16 %v264
    %v549 = vunpack.c.l.b16 %v265
    %v550 = vunpack.c.h.b16 %v265
    %v551 = vunpack.c.l.b16 %v266
    %v552 = vunpack.c.l.b16 %v267
    %v553 = vunpack.c.h.b16 %v267
    %v554 = vunpack.c.l.b16 %v268
    %v555 = vunpack.c.l.b16 %v269
    %v556 = vunpack.c.h.b16 %v269
    %v557 = vunpack.c.l.b16 %v270
    %v558 = vunpack.c.l.b16 %v271
    %v559 = vunpack.c.h.b16 %v271
    %v560 = vunpack.c.l.b16 %v272
    %v561 = vunpack.c.l.b16 %v273
    %v562 = vunpack.c.h.b16 %v273
    %v563 = vunpack.c.l.b16 %v274
    %v564 = vunpack.c.l.b16 %v275
    %v565 = vunpack.c.h.b16 %v275
    %v566 = vunpack.c.l.b16 %v276
    %v567 = vunpack.c.l.b16 %v277
    %v568 = vunpack.c.h.b16 %v277
    %v569 = vunpack.c.l.b16 %v278
    %v570 = vunpack.c.l.b16 %v279
    %v571 = vunpack.c.h.b16 %v279
    %v572 = vunpack.c.l.b16 %v280
    %v573 = vunpack.c.l.b16 %v281
    %v574 = vunpack.c.h.b16 %v281
    %v575 = vunpack.c.l.b16 %v282
    %v576 = vunpack.c.l.b16 %v283
    %v577 = vunpack.c.h.b16 %v283
    %v578 = vunpack.c.l.b16 %v284
    %v579 = vunpack.c.l.b16 %v285
    %v580 = vunpack.c.h.b16 %v285
    %v581 = vunpack.c.l.b16 %v286
    %v582 = vunpack.c.l.b16 %v287
    %v583 = vunpack.c.h.b16 %v287
    %v584 = vunpack.c.l.b16 %v288
    %v585 = vunpack.c.l.b16 %v289
    %v586 = vunpack.c.h.b16 %v289
    %v587 = vunpack.c.l.b16 %v290
    %v588 = vunpack.c.l.b16 %v291
    %v589 = vunpack.c.h.b16 %v291
    %v590 = vunpack.c.l.b16 %v292
    %v591 = vunpack.c.l.b16 %v293
    %v592 = vunpack.c.h.b16 %v293
    %v593 = vunpack.c.l.b16 %v294
    %v594 = vunpack.c.l.b16 %v295
    %v595 = vunpack.c.h.b16 %v295
    %v596 = vunpack.c.l.b16 %v296
    %v597 = vunpack.c.l.b16 %v297
    %v598 = vunpack.c.h.b16 %v297
    %v599 = vunpack.c.l.b16 %v298
    %v600 = vunpack.c.l.b16 %v299
    %v601 = vunpack.c.h.b16 %v299
    %v602 = vunpack.c.l.b16 %v300
    %v603 = vunpack.c.l.b16 %v301
    %v604 = vunpack.c.h.b16 %v301
    %v605 = vunpack.c.l.b16 %v302
    %v606 = vunpack.c.l.b16 %v303
    %v607 = vunpack.c.h.b16 %v303
    %v608 = vunpack.c.l.b16 %v304
    %v609 = vunpack.c.l.b16 %v305
    %v610 = vunpack.c.h.b16 %v305
    %v611 = vunpack.c.l.b16 %v306
    %v612 = vunpack.c.l.b16 %v307
    %v613 = vunpack.c.h.b16 %v307
    %v614 = vunpack.c.l.b16 %v308
    %v615 = vunpack.c.l.b16 %v309
    %v616 = vunpack.c.h.b16 %v309
    %v617 = vunpack.c.l.b16 %v310
    %v618 = vunpack.c.l.b16 %v311
    %v619 = vunpack.c.h.b16 %v311
    %v620 = vunpack.c.l.b16 %v312
    %v621 = vunpack.c.l.b16 %v313
    %v622 = vunpack.c.h.b16 %v313
    %v623 = vunpack.c.l.b16 %v314
    %v624 = vunpack.c.l.b16 %v315
    %v625 = vunpack.c.h.b16 %v315
    %v626 = vunpack.c.l.b16 %v316
    %v627 = vunpack.c.l.b16 %v317
    %v628 = vunpack.c.h.b16 %v317
    %v629 = vunpack.c.l.b16 %v318
    %v630 = vunpack.c.l.b16 %v319
    %v631 = vunpack.c.h.b16 %v319
    %v632 = vunpack.c.l.b16 %v320
    %v633 = vunpack.c.l.b16 %v321
    %v634 = vunpack.c.h.b16 %v321
    %v635 = vunpack.c.l.b16 %v322
    %v636 = vunpack.c.l.b16 %v323
    %v637 = vunpack.c.h.b16 %v323
    %v638 = vunpack.c.l.b16 %v324
    %v639 = vunpack.c.l.b16 %v325
    %v640 = vunpack.c.h.b16 %v325
    %v641 = vunpack.c.l.b16 %v326
    %v642 = vunpack.c.l.b16 %v327
    %v643 = vunpack.c.h.b16 %v327
    %v644 = vunpack.c.l.b16 %v328
    %v645 = vunpack.c.l.b16 %v329
    %v646 = vunpack.c.h.b16 %v329
    %v647 = vunpack.c.l.b16 %v330
    %v648 = vunpack.c.l.b16 %v331
    %v649 = vunpack.c.h.b16 %v331
    %v650 = vunpack.c.l.b16 %v332
    %v651 = vunpack.c.l.b16 %v333
    %v652 = vunpack.c.h.b16 %v333
    %v653 = vunpack.c.l.b16 %v334
    %v654 = vunpack.c.l.b16 %v335
    %v655 = vunpack.c.h.b16 %v335
    %v656 = vunpack.c.l.b16 %v336
    %v657 = vunpack.c.l.b16 %v337
    %v658 = vunpack.c.h.b16 %v337
    %v659 = vunpack.c.l.b16 %v338
    %v660 = vunpack.c.l.b16 %v339
    %v661 = vunpack.c.h.b16 %v339
    %v662 = vunpack.c.l.b16 %v340
    %v663 = vunpack.c.l.b16 %v341
    %v664 = vunpack.c.h.b16 %v341
    %v665 = vunpack.c.l.b16 %v342
    %v666 = vunpack.c.l.b16 %v343
    %v667 = vunpack.c.h.b16 %v343
    %v668 = vunpack.c.l.b16 %v344
    %v669 = vunpack.c.l.b16 %v345
    %v670 = vunpack.c.h.b16 %v345
    %v671 = vunpack.c.l.b16 %v346
    %v672 = vunpack.c.l.b16 %v347
    %v673 = vunpack.c.h.b16 %v347
    %v674 = vunpack.c.l.b16 %v348
    %v675 = vunpack.c.l.b16 %v349
    %v676 = vunpack.c.h.b16 %v349
    %v677 = vunpack.c.l.b16 %v350
    %v678 = vunpack.c.l.b16 %v351
    %v679 = vunpack.c.h.b16 %v351
    %v680 = vunpack.c.l.b16 %v352
    %v681 = vpack.c.b16 %v492, %v489
    %v682 = vpack.c.b16 %v493, %v490
    %v683 = vpack.c.b16 %v494, %v491
    %v684 = vpack.c.b16 %v498, %v495
    %v685 = vpack.c.b16 %v499, %v496
    %v686 = vpack.c.b16 %v500, %v497
    %v687 = vpack.c.b16 %v504, %v501
    %v688 = vpack.c.b16 %v505, %v502
    %v689 = vpack.c.b16 %v506, %v503
    %v690 = vpack.c.b16 %v510, %v507
    %v691 = vpack.c.b16 %v511, %v508
    %v692 = vpack.c.b16 %v512, %v509
    %v693 = vpack.c.b16 %v516, %v513
    %v694 = vpack.c.b16 %v517, %v514
    %v695 = vpack.c.b16 %v518, %v515
    %v696 = vpack.c.b16 %v522, %v519
    %v697 = vpack.c.b16 %v523, %v520
    %v698 = vpack.c.b16 %v524, %v521
    %v699 = vpack.c.b16 %v528, %v525
    %v700 = vpack.c.b16 %v529, %v526
    %v701 = vpack.c.b16 %v530, %v527
    %v702 = vpack.c.b16 %v534, %v531
    %v703 = vpack.c.b16 %v535, %v532
    %v704 = vpack.c.b16 %v536, %v533
    %v705 = vpack.c.b16 %v540, %v537
    %v706 = vpack.c.b16 %v541, %v538
    %v707 = vpack.c.b16 %v542, %v539
    %v708 = vpack.c.b16 %v546, %v543
    %v709 = vpack.c.b16 %v547, %v544
    %v710 = vpack.c.b16 %v548, %v545
    %v711 = vpack.c.b16 %v552, %v549
    %v712 = vpack.c.b16 %v553, %v550
    %v713 = vpack.c.b16 %v554, %v551
    %v714 = vpack.c.b16 %v558, %v555
    %v715 = vpack.c.b16 %v559, %v556
    %v716 = vpack.c.b16 %v560, %v557
    %v717 = vpack.c.b16 %v564, %v561
    %v718 = vpack.c.b16 %v565, %v562
    %v719 = vpack.c.b16 %v566, %v563
    %v720 = vpack.c.b16 %v570, %v567
    %v721 = vpack.c.b16 %v571, %v568
    %v722 = vpack.c.b16 %v572, %v569
    %v723 = vpack.c.b16 %v576, %v573
    %v724 = vpack.c.b16 %v577, %v574
    %v725 = vpack.c.b16 %v578, %v575
    %v726 = vpack.c.b16 %v582, %v579
    %v727 = vpack.c.b16 %v583, %v580
    %v728 = vpack.c.b16 %v584, %v581
    %v729 = vpack.c.b16 %v588, %v585
    %v730 = vpack.c.b16 %v589, %v586
    %v731 = vpack.c.b16 %v590, %v587
    %v732 = vpack.c.b16 %v594, %v591
    %v733 = vpack.c.b16 %v595, %v592
    %v734 = vpack.c.b16 %v596, %v593
    %v735 = vpack.c.b16 %v600, %v597
    %v736 = vpack.c.b16 %v601, %v598
    %v737 = vpack.c.b16 %v602, %v599
    %v738 = vpack.c.b16 %v606, %v603
    %v739 = vpack.c.b16 %v607, %v604
    %v740 = vpack.c.b16 %v608, %v605
    %v741 = vpack.c.b16 %v612, %v609
    %v742 = vpack.c.b16 %v613, %v610
    %v743 = vpack.c.b16 %v614, %v611
    %v744 = vpack.c.b16 %v618, %v615
    %v745 = vpack.c.b16 %v619, %v616
    %v746 = vpack.c.b16 %v620, %v617
    %v747 = vpack.c.b16 %v624, %v621
    %v748 = vpack.c.b16 %v625, %v622
    %v749 = vpack.c.b16 %v626, %v623
    %v750 = vpack.c.b16 %v630, %v627
    %v751 = vpack.c.b16 %v631, %v628
    %v752 = vpack.c.b16 %v632, %v629
    %v753 = vpack.c.b16 %v636, %v633
    %v754 = vpack.c.b16 %v637, %v634
    %v755 = vpack.c.b16 %v638, %v635
    %v756 = vpack.c.b16 %v642, %v639
    %v757 = vpack.c.b16 %v643, %v640
    %v758 = vpack.c.b16 %v644, %v641
    %v759 = vpack.c.b16 %v648, %v645
    %v760 = vpack.c.b16 %v649, %v646
    %v761 = vpack.c.b16 %v650, %v647
    %v762 = vpack.c.b16 %v654, %v651
    %v763 = vpack.c.b16 %v655, %v652
    %v764 = vpack.c.b16 %v656, %v653
    %v765 = vpack.c.b16 %v660, %v657
    %v766 = vpack.c.b16 %v661, %v658
    %v767 = vpack.c.b16 %v662, %v659
    %v768 = vpack.c.b16 %v666, %v663
    %v769 = vpack.c.b16 %v667, %v664
    %v770 = vpack.c.b16 %v668, %v665
    %v771 = vpack.c.b16 %v672, %v669
    %v772 = vpack.c.b16 %v673, %v670
    %v773 = vpack.c.b16 %v674, %v671
    %v774 = vpack.c.b16 %v678, %v675
    %v775 = vpack.c.b16 %v679, %v676
    %v776 = vpack.c.b16 %v680, %v677
    %873 = vmatpush.bf16.msra.mxu0 %v702
    %874 = vmatpush.bf16.msra.mxu0 %v699
    %875 = vmatpush.bf16.msra.mxu0 %v696
    %876 = vmatpush.bf16.msra.mxu0 %v693
    %877 = vmatpush.bf16.msra.mxu0 %v690
    %878 = vmatpush.bf16.msra.mxu0 %v687
    %879 = vmatpush.bf16.msra.mxu0 %v684
    %880 = vmatpush.bf16.msra.mxu0 %v681
    %881 = vmatmul.bf16.gmra.mxu0 %v221
    %v882 = vpop.f32.mrf.mxu0
    %v883 = vadd.f32 %v355, %v882
    %v884 = vpop.f32.mrf.mxu0
    %885 = vdwg.mxu0
    %886 = vmatpush.bf16.msra.mxu0 %v726
    %887 = vmatpush.bf16.msra.mxu0 %v723
    %888 = vmatpush.bf16.msra.mxu0 %v720
    %889 = vmatpush.bf16.msra.mxu0 %v717
    %890 = vmatpush.bf16.msra.mxu0 %v714
    %891 = vmatpush.bf16.msra.mxu0 %v711
    %892 = vmatpush.bf16.msra.mxu0 %v708
    %893 = vmatpush.bf16.msra.mxu0 %v705
    %894 = vmatmul.bf16.gmra.mxu0 %v222
    %v895 = vpop.f32.mrf.mxu0
    %v896 = vadd.f32 %v883, %v895
    %v897 = vpop.f32.mrf.mxu0
    %898 = vdwg.mxu0
    %899 = vmatpush.bf16.msra.mxu0 %v750
    %900 = vmatpush.bf16.msra.mxu0 %v747
    %901 = vmatpush.bf16.msra.mxu0 %v744
    %902 = vmatpush.bf16.msra.mxu0 %v741
    %903 = vmatpush.bf16.msra.mxu0 %v738
    %904 = vmatpush.bf16.msra.mxu0 %v735
    %905 = vmatpush.bf16.msra.mxu0 %v732
    %906 = vmatpush.bf16.msra.mxu0 %v729
    %907 = vmatmul.bf16.gmra.mxu0 %v223
    %v908 = vpop.f32.mrf.mxu0
    %v909 = vadd.f32 %v896, %v908
    %v910 = vpop.f32.mrf.mxu0
    %911 = vdwg.mxu0
    %912 = vmatpush.bf16.msra.mxu0 %v774
    %913 = vmatpush.bf16.msra.mxu0 %v771
    %914 = vmatpush.bf16.msra.mxu0 %v768
    %915 = vmatpush.bf16.msra.mxu0 %v765
    %916 = vmatpush.bf16.msra.mxu0 %v762
    %917 = vmatpush.bf16.msra.mxu0 %v759
    %918 = vmatpush.bf16.msra.mxu0 %v756
    %919 = vmatpush.bf16.msra.mxu0 %v753
    %920 = vmatmul.bf16.gmra.mxu0 %v224
    %v921 = vpop.f32.mrf.mxu0
    %v922 = vadd.f32 %v909, %v921
    %v923 = vpop.f32.mrf.mxu0
    %924 = vdwg.mxu0
    %925 = vmatpush.bf16.msra.mxu0 %v703
    %926 = vmatpush.bf16.msra.mxu0 %v700
    %927 = vmatpush.bf16.msra.mxu0 %v697
    %928 = vmatpush.bf16.msra.mxu0 %v694
    %929 = vmatpush.bf16.msra.mxu0 %v691
    %930 = vmatpush.bf16.msra.mxu0 %v688
    %931 = vmatpush.bf16.msra.mxu0 %v685
    %932 = vmatpush.bf16.msra.mxu0 %v682
    %933 = vmatmul.bf16.gmra.mxu0 %v221
    %v934 = vpop.f32.mrf.mxu0
    %v935 = vadd.f32 %v356, %v934
    %v936 = vpop.f32.mrf.mxu0
    %937 = vdwg.mxu0
    %938 = vmatpush.bf16.msra.mxu0 %v727
    %939 = vmatpush.bf16.msra.mxu0 %v724
    %940 = vmatpush.bf16.msra.mxu0 %v721
    %941 = vmatpush.bf16.msra.mxu0 %v718
    %942 = vmatpush.bf16.msra.mxu0 %v715
    %943 = vmatpush.bf16.msra.mxu0 %v712
    %944 = vmatpush.bf16.msra.mxu0 %v709
    %945 = vmatpush.bf16.msra.mxu0 %v706
    %946 = vmatmul.bf16.gmra.mxu0 %v222
    %v947 = vpop.f32.mrf.mxu0
    %v948 = vadd.f32 %v935, %v947
    %v949 = vpop.f32.mrf.mxu0
    %950 = vdwg.mxu0
    %951 = vmatpush.bf16.msra.mxu0 %v751
    %952 = vmatpush.bf16.msra.mxu0 %v748
    %953 = vmatpush.bf16.msra.mxu0 %v745
    %954 = vmatpush.bf16.msra.mxu0 %v742
    %955 = vmatpush.bf16.msra.mxu0 %v739
    %956 = vmatpush.bf16.msra.mxu0 %v736
    %957 = vmatpush.bf16.msra.mxu0 %v733
    %958 = vmatpush.bf16.msra.mxu0 %v730
    %959 = vmatmul.bf16.gmra.mxu0 %v223
    %v960 = vpop.f32.mrf.mxu0
    %v961 = vadd.f32 %v948, %v960
    %v962 = vpop.f32.mrf.mxu0
    %963 = vdwg.mxu0
    %964 = vmatpush.bf16.msra.mxu0 %v775
    %965 = vmatpush.bf16.msra.mxu0 %v772
    %966 = vmatpush.bf16.msra.mxu0 %v769
    %967 = vmatpush.bf16.msra.mxu0 %v766
    %968 = vmatpush.bf16.msra.mxu0 %v763
    %969 = vmatpush.bf16.msra.mxu0 %v760
    %970 = vmatpush.bf16.msra.mxu0 %v757
    %971 = vmatpush.bf16.msra.mxu0 %v754
    %972 = vmatmul.bf16.gmra.mxu0 %v224
    %v973 = vpop.f32.mrf.mxu0
    %v974 = vadd.f32 %v961, %v973
    %v975 = vpop.f32.mrf.mxu0
    %976 = vdwg.mxu0
    %977 = vmatpush.bf16.msra.mxu0 %v704
    %978 = vmatpush.bf16.msra.mxu0 %v701
    %979 = vmatpush.bf16.msra.mxu0 %v698
    %980 = vmatpush.bf16.msra.mxu0 %v695
    %981 = vmatpush.bf16.msra.mxu0 %v692
    %982 = vmatpush.bf16.msra.mxu0 %v689
    %983 = vmatpush.bf16.msra.mxu0 %v686
    %984 = vmatpush.bf16.msra.mxu0 %v683
    %985 = vmatmul.bf16.gmra.mxu0 %v221
    %v986 = vpop.f32.mrf.mxu0
    %v987 = vadd.f32 %v357, %v986
    %v988 = vpop.f32.mrf.mxu0
    %989 = vdwg.mxu0
    %990 = vmatpush.bf16.msra.mxu0 %v728
    %991 = vmatpush.bf16.msra.mxu0 %v725
    %992 = vmatpush.bf16.msra.mxu0 %v722
    %993 = vmatpush.bf16.msra.mxu0 %v719
    %994 = vmatpush.bf16.msra.mxu0 %v716
    %995 = vmatpush.bf16.msra.mxu0 %v713
    %996 = vmatpush.bf16.msra.mxu0 %v710
    %997 = vmatpush.bf16.msra.mxu0 %v707
    %998 = vmatmul.bf16.gmra.mxu0 %v222
    %v999 = vpop.f32.mrf.mxu0
    %v1000 = vadd.f32 %v987, %v999
    %v1001 = vpop.f32.mrf.mxu0
    %1002 = vdwg.mxu0
    %1003 = vmatpush.bf16.msra.mxu0 %v752
    %1004 = vmatpush.bf16.msra.mxu0 %v749
    %1005 = vmatpush.bf16.msra.mxu0 %v746
    %1006 = vmatpush.bf16.msra.mxu0 %v743
    %1007 = vmatpush.bf16.msra.mxu0 %v740
    %1008 = vmatpush.bf16.msra.mxu0 %v737
    %1009 = vmatpush.bf16.msra.mxu0 %v734
    %1010 = vmatpush.bf16.msra.mxu0 %v731
    %1011 = vmatmul.bf16.gmra.mxu0 %v223
    %v1012 = vpop.f32.mrf.mxu0
    %v1013 = vadd.f32 %v1000, %v1012
    %v1014 = vpop.f32.mrf.mxu0
    %1015 = vdwg.mxu0
    %1016 = vmatpush.bf16.msra.mxu0 %v776
    %1017 = vmatpush.bf16.msra.mxu0 %v773
    %1018 = vmatpush.bf16.msra.mxu0 %v770
    %1019 = vmatpush.bf16.msra.mxu0 %v767
    %1020 = vmatpush.bf16.msra.mxu0 %v764
    %1021 = vmatpush.bf16.msra.mxu0 %v761
    %1022 = vmatpush.bf16.msra.mxu0 %v758
    %1023 = vmatpush.bf16.msra.mxu0 %v755
    %1024 = vmatmul.bf16.gmra.mxu0 %v224
    %v1025 = vpop.f32.mrf.mxu0
    %v1026 = vadd.f32 %v1013, %v1025
    %v1027 = vpop.f32.mrf.mxu0
    %1028 = vdwg.mxu0
    %v1029 = vmax.f32 %v922, 0.0
    %v1030 = vmax.f32 %v974, 0.0
    %v1031 = vmax.f32 %v1026, 0.0
    %v1032 = vld [vmem:[%s5] sm:$0x7]
    %v1034 = vperm.slane %v1032, 0
    %v1035 = vperm.slane %v1032, 1
    %v1036 = vperm.slane %v1032, 2
    %v1040 = vmul.f32 %v1029, %v1034
    %v1041 = vmul.f32 %v1030, %v1035
    %v1042 = vmul.f32 %v1031, %v1036
    %v1043 = vadd.f32 %v1040, %v1041
    %v1044 = vadd.f32 %v1043, %v1042
    %1045 = vadd.xlane.f32.xlu0 %v1044
    %v1046 = vpop.xlane.xlu0 %1045
    %v1047 = vld [vmem:[#allocation2] sm:$0x1]
    %v1049 = vperm.slane %v1047, 0
    %v1051 = vadd.f32 %v1046, %v1049
    %vm1052 = vcmask 7168
    %1053 = vst.msk [vmem:[%s7] sm:$0xff] %vm1052, %v1051
    // Predicated region
    $region50: #{_lambda_.1} parent=1 // pred_check
      _
    $region51: #{_lambda_.1} parent=1 // pred_check_branch
      %1055 = sbr.rel (0) target = $region53
    $region52: #{_lambda_.1} parent=1 // pred_region
      _
    $region53: #{_lambda_.1} parent=1 // pred_fallthru
      _
    // Predicated region
    $region54: #{_lambda_.1} parent=1 // pred_check
      _
    $region55: #{_lambda_.1} parent=1 // pred_check_branch
      %1057 = sbr.rel (0) target = $region57
    $region56: #{_lambda_.1} parent=1 // pred_region
      _
    $region57: #{_lambda_.1} parent=1 // pred_fallthru
      _
    %1058 = vsyncpa [#allocation4], 1
    %1059 = vsyncpa [#allocation6], 1
    %1060 = vsyncpa [#allocation9], 1

</llo_original>
